<compile_context>
chip_gen: v7x
topology: tpu7x:2x2x1
jax: 0.10.0
libtpu: 0.0.40
codegen_flags: <defaults>
</compile_context>

<pallas_src>
import functools
import math

import jax
import jax.numpy as jnp
from jax import lax
from jax.experimental import pallas as pl
from jax.experimental.pallas import tpu as pltpu


def _round_up(x, m):
    return (x + m - 1) // m * m


# ----------------------------------------------------------------------------
# Generation-aware kernel configuration (tile sizes / VMEM budget).
# ----------------------------------------------------------------------------
def _kernel_cfg():
    vmem_bytes = 64 * 1024 * 1024
    try:
        info = pltpu.get_tpu_info()
        for name in ("vmem_capacity_bytes", "vmem_bytes", "vmem_size_bytes"):
            v = getattr(info, name, None)
            if v:
                vmem_bytes = int(v)
                break
    except Exception:
        pass
    if vmem_bytes <= 64 * 1024 * 1024:
        # v7x-class: 64 MiB VMEM per TensorCore -> small tiles, 48 MiB cap.
        return {"tile_m": 256, "vmem_limit": 48 * 1024 * 1024}
    # v5e / v6e: 128 MiB VMEM -> bigger tiles, more headroom.
    return {"tile_m": 1024, "vmem_limit": 96 * 1024 * 1024}


# ----------------------------------------------------------------------------
# Pallas kernel 1: tiled matmul (1x1 convs + im2col'ed stem), f32 scratch acc.
# ----------------------------------------------------------------------------
def _matmul_kernel(x_ref, w_ref, o_ref, acc_ref):
    @pl.when(pl.program_id(2) == 0)
    def _init():
        acc_ref[...] = jnp.zeros_like(acc_ref)

    acc_ref[...] += jnp.dot(x_ref[...], w_ref[...],
                            preferred_element_type=jnp.float32)

    @pl.when(pl.program_id(2) == pl.num_programs(2) - 1)
    def _store():
        o_ref[...] = acc_ref[...].astype(o_ref.dtype)


def _matmul(x2d, w_mat, tile_m, vmem_limit, out_dtype):
    """x2d (M, K) x w_mat (K, Cout) -> (M, Cout); bf16 MXU, f32 accumulation."""
    M, K = x2d.shape
    _, Cout = w_mat.shape
    tm = min(tile_m, _round_up(M, 8))
    Mp = _round_up(M, tm)
    tn = 512 if (Cout > 512 and Cout % 512 == 0) else Cout
    tk = 512 if (K > 512 and K % 512 == 0) else K

    x2d = x2d.astype(jnp.bfloat16)
    if Mp != M:
        x2d = jnp.pad(x2d, ((0, Mp - M), (0, 0)))

    out = pl.pallas_call(
        _matmul_kernel,
        out_shape=jax.ShapeDtypeStruct((Mp, Cout), out_dtype),
        grid=(Mp // tm, Cout // tn, K // tk),
        in_specs=[pl.BlockSpec((tm, tk), lambda i, j, k: (i, k)),
                  pl.BlockSpec((tk, tn), lambda i, j, k: (k, j))],
        out_specs=pl.BlockSpec((tm, tn), lambda i, j, k: (i, j)),
        scratch_shapes=[pltpu.VMEM((tm, tn), jnp.float32)],
        compiler_params=pltpu.CompilerParams(
            dimension_semantics=("parallel", "parallel", "arbitrary"),
            vmem_limit_bytes=vmem_limit),
    )(x2d, w_mat.astype(jnp.bfloat16))
    return out[:M] if Mp != M else out


@functools.partial(jax.jit,
                   static_argnames=("stride", "tile_m", "vmem_limit", "out_dtype"))
def conv1x1(x, w_mat, *, stride=1, tile_m, vmem_limit, out_dtype=jnp.bfloat16):
    """1x1 conv (no bias) in NHWC via the tiled matmul kernel."""
    if stride > 1:
        x = x[:, ::stride, ::stride, :]
    N, H, W, C = x.shape
    y = _matmul(x.reshape(N * H * W, C), w_mat, tile_m, vmem_limit, out_dtype)
    return y.reshape(N, H, W, w_mat.shape[1])


@functools.partial(jax.jit, static_argnames=("tile_m", "vmem_limit"))
def stem_conv(x, w_mat, *, tile_m, vmem_limit):
    """7x7 / stride-2 / pad-3 / Cin=4 stem as im2col (K=196) + one MXU matmul."""
    N, H, W, C = x.shape
    OH = (H + 6 - 7) // 2 + 1
    OW = (W + 6 - 7) // 2 + 1
    xp = jnp.pad(x, ((0, 0), (3, 3), (3, 3), (0, 0)))
    cols = []
    for kh in range(7):
        for kw in range(7):
            cols.append(xp[:, kh:kh + 2 * OH:2, kw:kw + 2 * OW:2, :])
    xcol = jnp.concatenate(cols, axis=-1).reshape(N * OH * OW, 49 * C)
    y = _matmul(xcol, w_mat, tile_m, vmem_limit, jnp.bfloat16)
    return y.reshape(N, OH, OW, w_mat.shape[1])


# ----------------------------------------------------------------------------
# Pallas kernel 2: tap-decomposed "same" conv, M-tiled, fused bias.
# ----------------------------------------------------------------------------
def _conv_tap_kernel(x_ref, w_ref, b_ref, o_ref, *, shifts, tile_m):
    """grid step = (sample n, M-tile m, Cin-block kb).

    x_ref : (1, R, Cin_blk)    bf16  zero-padded plane, rows flattened hp*Wp+wp.
    w_ref : (T, Cin_blk, Cout) bf16  per-tap weight matrices.
    b_ref : (1, Cout)          f32   fused bias (zeros when conv has none).
    o_ref : (1, tile_m, Cout)        output rows g = oh*Wp + ow, accumulated
                                     across Cin blocks (kb is the last axis).
    """
    kb = pl.program_id(2)
    base = pl.multiple_of(pl.program_id(1) * tile_m, 8)

    acc = jnp.dot(x_ref[0, pl.ds(base + shifts[0], tile_m), :], w_ref[0],
                  preferred_element_type=jnp.float32)
    for t in range(1, len(shifts)):
        acc = acc + jnp.dot(x_ref[0, pl.ds(base + shifts[t], tile_m), :], w_ref[t],
                            preferred_element_type=jnp.float32)

    @pl.when(kb == 0)
    def _first():
        o_ref[0] = (acc + b_ref[...]).astype(o_ref.dtype)

    @pl.when(kb > 0)
    def _accum():
        o_ref[0] = (o_ref[0].astype(jnp.float32) + acc).astype(o_ref.dtype)


@functools.partial(jax.jit,
                   static_argnames=("dilations", "tile_m", "vmem_limit", "out_dtype"))
def conv_dilated_same(x, w_taps, bias, *, dilations, tile_m, vmem_limit,
                      out_dtype=jnp.bfloat16):
    """Fused 3x3 'same' conv(s) (padding = dilation) over one shared padded image.

    `dilations` may hold one dilation (a plain bottleneck conv) or several
    (the fused classifier heads, whose outputs are summed).  `w_taps` is
    (len(dilations)*9, Cin, Cout) bf16, head-major then (kh, kw) row-major.
    """
    N, H, W, Cin = x.shape
    T, _, Cout = w_taps.shape
    P = max(dilations)
    Hp, Wp = H + 2 * P, W + 2 * P
    mo = H * Wp                                   # 'wide' output rows / sample

    shifts = []
    for d in dilations:
        off = P - d
        for kh in range(3):
            for kw in range(3):
                shifts.append((off + kh * d) * Wp + (off + kw * d))
    shifts = tuple(shifts)
    assert len(shifts) == T

    tm = min(tile_m, _round_up(mo, 8))
    mo_p = _round_up(mo, tm)
    n_m = mo_p // tm
    max_shift = max(shifts)
    R = _round_up(mo_p + max_shift, 8)            # flat rows incl. tap overhang

    a = jnp.pad(x.astype(jnp.bfloat16), ((0, 0), (P, P), (P, P), (0, 0)))
    a = a.reshape(N, Hp * Wp, Cin)
    a = jnp.pad(a, ((0, 0), (0, R - Hp * Wp), (0, 0)))

    cin_blk = 512 if (Cin > 512 and Cin % 512 == 0) else Cin
    n_kb = Cin // cin_blk

    if bias is None:
        b = jnp.zeros((1, Cout), jnp.float32)
    else:
        b = bias.reshape(1, Cout).astype(jnp.float32)

    out = pl.pallas_call(
        functools.partial(_conv_tap_kernel, shifts=shifts, tile_m=tm),
        out_shape=jax.ShapeDtypeStruct((N, mo_p, Cout), out_dtype),
        grid=(N, n_m, n_kb),
        in_specs=[
            pl.BlockSpec((1, R, cin_blk), lambda n, m, k: (n, 0, k)),
            pl.BlockSpec((T, cin_blk, Cout), lambda n, m, k: (0, k, 0)),
            pl.BlockSpec((1, Cout), lambda n, m, k: (0, 0)),
        ],
        out_specs=pl.BlockSpec((1, tm, Cout), lambda n, m, k: (n, m, 0)),
        compiler_params=pltpu.CompilerParams(
            dimension_semantics=("parallel", "parallel", "arbitrary"),
            vmem_limit_bytes=vmem_limit),
    )(a, w_taps, b)

    out = out[:, :mo].reshape(N, H, Wp, Cout)[:, :, :W, :]   # drop wide columns
    return out


# ----------------------------------------------------------------------------
# Pallas kernel 3: element-wise max of the three scale outputs (NHWC, no plumbing)
# ----------------------------------------------------------------------------
def _max3_kernel(a_ref, b_ref, c_ref, o_ref):
    o_ref[...] = jnp.maximum(jnp.maximum(a_ref[...], b_ref[...]), c_ref[...])


def pallas_max3(a, b, c):
    return pl.pallas_call(
        _max3_kernel,
        out_shape=jax.ShapeDtypeStruct(a.shape, a.dtype),
    )(a, b, c)


# ----------------------------------------------------------------------------
# XLA glue: BN (batch stats), ReLU, ceil-mode max-pool, align_corners resize.
# ----------------------------------------------------------------------------
def relu(x):
    return jnp.maximum(x, jnp.zeros((), x.dtype))


def batchnorm(x, eps=1e-5):
    # Freshly-initialized BatchNorm2d in train mode: batch statistics, identity
    # affine.  Stats are computed in f32, activations stay bf16.
    xf = x.astype(jnp.float32)
    mean = jnp.mean(xf, axis=(0, 1, 2), keepdims=True)
    var = jnp.var(xf, axis=(0, 1, 2), keepdims=True)
    return ((xf - mean) * lax.rsqrt(var + eps)).astype(x.dtype)


def maxpool2d_ceil(x, k=3, s=2, p=1):
    """MaxPool2d(kernel=3, stride=2, padding=1, ceil_mode=True), NHWC."""
    N, H, W, C = x.shape

    def out_dim(d_):
        o = math.ceil((d_ + 2 * p - k) / s) + 1
        if (o - 1) * s >= d_ + p:      # PyTorch: window must start inside input+pad
            o -= 1
        return o

    OH, OW = out_dim(H), out_dim(W)
    pr_h = (OH - 1) * s + k - p - H
    pr_w = (OW - 1) * s + k - p - W
    neg = jnp.asarray(-jnp.inf, dtype=x.dtype)
    xp = lax.pad(x, neg, ((0, 0, 0), (p, pr_h, 0), (p, pr_w, 0), (0, 0, 0)))
    return lax.reduce_window(xp, neg, lax.max,
                             (1, k, k, 1), (1, s, s, 1), "VALID")


def upsample_bilinear(x, size):
    """nn.UpsamplingBilinear2d (align_corners=True), NHWC."""
    out_h, out_w = int(size[0]), int(size[1])
    N, H, W, C = x.shape

    def coords(out, inp):
        if out == 1 or inp == 1:
            pos = jnp.zeros((out,), jnp.float32)
        else:
            pos = jnp.arange(out, dtype=jnp.float32) * (inp - 1) / (out - 1)
        lo = jnp.clip(jnp.floor(pos), 0, inp - 1).astype(jnp.int32)
        hi = jnp.clip(lo + 1, 0, inp - 1)
        frac = pos - lo.astype(jnp.float32)
        return frac, lo, hi

    wy, y0, y1 = coords(out_h, H)
    wx, x0, x1 = coords(out_w, W)

    top_l = x[:, y0][:, :, x0]
    top_r = x[:, y0][:, :, x1]
    bot_l = x[:, y1][:, :, x0]
    bot_r = x[:, y1][:, :, x1]
    wy = wy[None, :, None, None]
    wx = wx[None, None, :, None]
    top = top_l * (1.0 - wx) + top_r * wx
    bot = bot_l * (1.0 - wx) + bot_r * wx
    return top * (1.0 - wy) + bot * wy


def outS(i):
    i = int(i)
    i = (i + 1) / 2
    i = int(math.ceil((i + 1) / 2.0))
    i = (i + 1) / 2
    return i


# ----------------------------------------------------------------------------
# Parameters: ResNet-101 DeepLab, weights ~ N(0, 0.01), pre-laid-out for the MXU.
# ----------------------------------------------------------------------------
class KeyGen:
    def __init__(self, key):
        self.key = key

    def next(self):
        self.key, sub = jax.random.split(self.key)
        return sub


def conv_w(kg, cout, cin, kh, kw):
    return jax.random.normal(kg.next(), (cout, cin, kh, kw), jnp.float32) * 0.01


def _to_mat(w):       # (Cout, Cin, 1, 1) -> (Cin, Cout) bf16
    cout, cin = w.shape[:2]
    return jnp.transpose(w.reshape(cout, cin), (1, 0)).astype(jnp.bfloat16)


def _to_taps(w):      # (Cout, Cin, KH, KW) -> (KH*KW, Cin, Cout) bf16
    cout, cin, kh, kw = w.shape
    return jnp.transpose(w, (2, 3, 1, 0)).reshape(kh * kw, cin, cout).astype(jnp.bfloat16)


CLS_DILATIONS = (6, 12, 18, 24)


def make_params(no_labels, key):
    kg = KeyGen(key)
    p = {}
    # Stem 7x7: stored as (49*4, 64) for the im2col matmul.
    w = conv_w(kg, 64, 4, 7, 7)
    p["stem_w"] = jnp.transpose(w, (2, 3, 1, 0)).reshape(49 * 4, 64).astype(jnp.bfloat16)

    inplanes = 64
    # (planes, blocks, stride, dilation) for layer1..layer4, layers=[3, 4, 23, 3]
    layers_cfg = [(64, 3, 1, 1), (128, 4, 2, 1), (256, 23, 1, 2), (512, 3, 1, 4)]
    p["layers"] = []
    for planes, blocks, stride, dilation in layers_cfg:
        layer = []
        for bidx in range(blocks):
            in_ch = inplanes if bidx == 0 else planes * 4
            s = stride if bidx == 0 else 1
            blk = {
                "w1": _to_mat(conv_w(kg, planes, in_ch, 1, 1)),
                "w2": _to_taps(conv_w(kg, planes, planes, 3, 3)),
                "w3": _to_mat(conv_w(kg, planes * 4, planes, 1, 1)),
                "stride": s,
                "dilation": dilation,
            }
            if bidx == 0:
                blk["wd"] = _to_mat(conv_w(kg, planes * 4, inplanes, 1, 1))
            layer.append(blk)
        inplanes = planes * 4
        p["layers"].append(layer)

    # Classifier_Module: 4 dilated 3x3 convs (2048 -> NoLabels, bias), fused into
    # one (36, 2048, NoLabels) tap stack; bias = sum of the 4 head biases.
    heads = [_to_taps(conv_w(kg, no_labels, 2048, 3, 3)) for _ in CLS_DILATIONS]
    p["cls_w"] = jnp.concatenate(heads, axis=0)
    p["cls_b"] = jnp.zeros((no_labels,), jnp.float32)
    return p


# ----------------------------------------------------------------------------
# Forward pass (all NHWC internally, bf16 activations between layers)
# ----------------------------------------------------------------------------
def bottleneck(x, blk, tm, vl):
    s, d = blk["stride"], blk["dilation"]
    out = relu(batchnorm(conv1x1(x, blk["w1"], stride=s, tile_m=tm, vmem_limit=vl)))
    out = relu(batchnorm(conv_dilated_same(out, blk["w2"], None, dilations=(d,),
                                           tile_m=tm, vmem_limit=vl)))
    out = batchnorm(conv1x1(out, blk["w3"], tile_m=tm, vmem_limit=vl))
    if "wd" in blk:
        residual = batchnorm(conv1x1(x, blk["wd"], stride=s, tile_m=tm, vmem_limit=vl))
    else:
        residual = x
    return relu(out + residual)


def scale_forward(x, p, cfg):
    tm, vl = cfg["tile_m"], cfg["vmem_limit"]
    x = stem_conv(x, p["stem_w"], tile_m=tm, vmem_limit=vl)
    x = relu(batchnorm(x))
    x = maxpool2d_ceil(x, k=3, s=2, p=1)
    for layer in p["layers"]:
        for blk in layer:
            x = bottleneck(x, blk, tm, vl)
    # Fused classifier heads (one Pallas call, f32 final output).
    return conv_dilated_same(x, p["cls_w"], p["cls_b"], dilations=CLS_DILATIONS,
                             tile_m=tm, vmem_limit=vl, out_dtype=jnp.float32)


def ms_deeplab_forward(x_nchw, p, cfg):
    H, W = int(x_nchw.shape[2]), int(x_nchw.shape[3])
    size1 = (int(H * 0.75) + 1, int(W * 0.75) + 1)
    size2 = (int(H * 0.5) + 1, int(W * 0.5) + 1)
    size3 = (int(outS(H)), int(outS(W)))

    x = jnp.transpose(x_nchw, (0, 2, 3, 1)).astype(jnp.float32)   # NCHW -> NHWC once
    x2 = upsample_bilinear(x, size1)
    x3 = upsample_bilinear(x, size2)

    o1 = scale_forward(x, p, cfg)
    o2 = upsample_bilinear(scale_forward(x2, p, cfg), size3)
    o3 = upsample_bilinear(scale_forward(x3, p, cfg), size3)

    fused = pallas_max3(o1, o2, o3)                               # max in NHWC

    def to_nchw(t):
        return jnp.transpose(t, (0, 3, 1, 2))

    return [to_nchw(o1), to_nchw(o2), to_nchw(o3), to_nchw(fused)]


# ----------------------------------------------------------------------------
if __name__ == "__main__":
    key = jax.random.PRNGKey(0)
    pkey, xkey = jax.random.split(key)

    NO_LABELS = 5
    params = make_params(NO_LABELS, pkey)
    cfg = _kernel_cfg()

    # Input: N=2, C=4 (required by conv1), 16x16 spatial (keeps all three scale
    # outputs at the same 3x3 size, as the module's torch.max requires).
    x = jax.random.normal(xkey, (2, 4, 16, 16), jnp.float32)

    outs = ms_deeplab_forward(x, params, cfg)
    outs = [jax.block_until_ready(o) for o in outs]
    print("KERNEL_OK")
</pallas_src>

<mosaic_0001>
module attributes {stable_mosaic.version = 11 : i64} {
  func.func @_matmul_kernel(%arg0: i32, %arg1: i32, %arg2: i32, %arg3: memref<128x196xbf16, #tpu.memory_space<vmem>>, %arg4: memref<196x64xbf16, #tpu.memory_space<vmem>>, %arg5: memref<128x64xbf16, #tpu.memory_space<vmem>>, %arg6: memref<128x64xf32, #tpu.memory_space<vmem>>) attributes {dimension_semantics = [#tpu.dimension_semantics<parallel>, #tpu.dimension_semantics<parallel>, #tpu.dimension_semantics<arbitrary>], iteration_bounds = array<i64: 1, 1, 1>, scalar_prefetch = 0 : i64, scratch_operands = 1 : i64, tpu.core_type = #tpu.core_type<tc>, window_params = [{transform_indices = @transform_0, window_bounds = array<i64: 128, 196>}, {transform_indices = @transform_1, window_bounds = array<i64: 196, 64>}, {transform_indices = @transform_2, window_bounds = array<i64: 128, 64>}]} {
    %c0_i32 = arith.constant 0 : i32
    %0 = arith.cmpi eq, %arg2, %c0_i32 : i32
    %1 = arith.extui %0 : i1 to i32
    %c0_i32_0 = arith.constant 0 : i32
    %2 = arith.cmpi ne, %1, %c0_i32_0 : i32
    scf.if %2 {
      %cst_10 = arith.constant 0.000000e+00 : f32
      %12 = vector.broadcast %cst_10 : f32 to vector<128x64xf32>
      %c0_11 = arith.constant 0 : index
      %c0_12 = arith.constant 0 : index
      %13 = vector.load %arg6[%c0_11, %c0_12] : memref<128x64xf32, #tpu.memory_space<vmem>>, vector<128x64xf32>
      tpu.vector_store %arg6[%c0_11, %c0_12], %12 {strides = array<i32>} : memref<128x64xf32, #tpu.memory_space<vmem>>, vector<128x64xf32>,
    } else {
    }
    %c0 = arith.constant 0 : index
    %c0_1 = arith.constant 0 : index
    %3 = vector.load %arg6[%c0, %c0_1] : memref<128x64xf32, #tpu.memory_space<vmem>>, vector<128x64xf32>
    %c0_2 = arith.constant 0 : index
    %c0_3 = arith.constant 0 : index
    %4 = vector.load %arg3[%c0_2, %c0_3] : memref<128x196xbf16, #tpu.memory_space<vmem>>, vector<128x196xbf16>
    %c0_4 = arith.constant 0 : index
    %c0_5 = arith.constant 0 : index
    %5 = vector.load %arg4[%c0_4, %c0_5] : memref<196x64xbf16, #tpu.memory_space<vmem>>, vector<196x64xbf16>
    %cst = arith.constant dense<0.000000e+00> : vector<128x64xf32>
    %6 = tpu.matmul %4, %5, %cst {dimension_numbers = #tpu.dot_dimension_numbers<[1], [0], [0], [1], [0, 0, 1, 1], [], []>} : vector<128x196xbf16>, vector<196x64xbf16>, vector<128x64xf32> -> vector<128x64xf32>
    %7 = arith.addf %3, %6 : vector<128x64xf32>
    %c0_6 = arith.constant 0 : index
    %c0_7 = arith.constant 0 : index
    %8 = vector.load %arg6[%c0_6, %c0_7] : memref<128x64xf32, #tpu.memory_space<vmem>>, vector<128x64xf32>
    tpu.vector_store %arg6[%c0_6, %c0_7], %7 {strides = array<i32>} : memref<128x64xf32, #tpu.memory_space<vmem>>, vector<128x64xf32>,
    %c0_i32_8 = arith.constant 0 : i32
    %9 = arith.cmpi eq, %arg2, %c0_i32_8 : i32
    %10 = arith.extui %9 : i1 to i32
    %c0_i32_9 = arith.constant 0 : i32
    %11 = arith.cmpi ne, %10, %c0_i32_9 : i32
    scf.if %11 {
      %c0_10 = arith.constant 0 : index
      %c0_11 = arith.constant 0 : index
      %12 = vector.load %arg6[%c0_10, %c0_11] : memref<128x64xf32, #tpu.memory_space<vmem>>, vector<128x64xf32>
      %13 = arith.truncf %12 : vector<128x64xf32> to vector<128x64xbf16>
      %c0_12 = arith.constant 0 : index
      %c0_13 = arith.constant 0 : index
      %14 = vector.load %arg5[%c0_12, %c0_13] : memref<128x64xbf16, #tpu.memory_space<vmem>>, vector<128x64xbf16>
      tpu.vector_store %arg5[%c0_12, %c0_13], %13 {strides = array<i32>} : memref<128x64xbf16, #tpu.memory_space<vmem>>, vector<128x64xbf16>,
    } else {
    }
    return
  }
  func.func @transform_0(%arg0: i32, %arg1: i32, %arg2: i32) -> (i32, i32) {
    %c0_i32 = arith.constant 0 : i32
    return %arg0, %arg2 : i32, i32
  }
  func.func @transform_1(%arg0: i32, %arg1: i32, %arg2: i32) -> (i32, i32) {
    %c0_i32 = arith.constant 0 : i32
    return %arg2, %arg1 : i32, i32
  }
  func.func @transform_2(%arg0: i32, %arg1: i32, %arg2: i32) -> (i32, i32) {
    %c0_i32 = arith.constant 0 : i32
    return %arg0, %arg1 : i32, i32
  }
}

</mosaic_0001>

<llo_original>
// kernel: stem_conv.1
$region0: #{stem_conv.1}
  #allocation0 [shape = 'u32[]', space=smem, size = 0x4, offset = 0x4, fixed_abs, tag = 'smem constant byte address 0x4 - core index']
  #allocation1 [shape = 'u32[144,128]{1,0:T(1,128)}', space=vmem, size = 0x12000, scoped, tag = 'internal scratch']
  #allocation2 [shape = 'f32[128,64]{1,0:T(8,128)}', space=vmem, size = 0x10000, scoped, tag = 'scratch operand']
  %s0 = inlined_call_operand.vmem [shape: bf16[128,196], index: 0, kind: input, shape index: {}]
  %s1 = inlined_call_operand.vmem [shape: bf16[196,64], index: 1, kind: input, shape index: {}]
  %s2 = inlined_call_operand.hbm [shape: bf16[128,64], index: 2, kind: output, shape index: {}]
  %s3 = sld [smem:[#allocation0]]
  $region26: #{stem_conv.1} parent=0
    _
  %s5 = ssub.s32 1, %s3
  %s6 = scalar_select 0, %s5, %s3
  $region1: #{stem_conv.1} parent=0
    #allocation3 [shape = 'u8[32768]{0}', space=vmem, size = 0x8000, scoped, tag = 'output window, operand 0, single buffered']
    #allocation4 [shape = 's32[1]{0}', space=sflag, size = 0x4, scoped, tag = 'scoped memory for stem_conv.1']
    %7 = vsyncpa [#allocation4], 0
    // Predicated region
    $region2: #{stem_conv.1} parent=1 // pred_check
      _
    $region3: #{stem_conv.1} parent=1 // pred_check_branch
      %9 = sbr.rel (0) target = $region5
    $region4: #{stem_conv.1} parent=1 // pred_region
      _
    $region5: #{stem_conv.1} parent=1 // pred_fallthru
      _
    // Predicated region
    $region6: #{stem_conv.1} parent=1 // pred_check
      _
    $region7: #{stem_conv.1} parent=1 // pred_check_branch
      %11 = sbr.rel (0) target = $region9
    $region8: #{stem_conv.1} parent=1 // pred_region
      _
    $region9: #{stem_conv.1} parent=1 // pred_fallthru
      _
    %p13 = scmp.eq.s32.totalorder 0, 0
    // Predicated region
    $region10: #{stem_conv.1} parent=1 // pred_check
      %p14 = pneg %p13
    $region11: #{stem_conv.1} parent=1 // pred_check_branch
      %16 = sbr.rel (%p14) target = $region13
    $region12: #{stem_conv.1} parent=1 // pred_region
      %vm17 = vcmask 523264
      %18 = vst.msk [vmem:[#allocation2] sm:$0xff] %vm17, 0.0
      %19 = vst.msk [vmem:[#allocation2 + $0x8] sm:$0xff] %vm17, 0.0
      %20 = vst.msk [vmem:[#allocation2 + $0x10] sm:$0xff] %vm17, 0.0
      %21 = vst.msk [vmem:[#allocation2 + $0x18] sm:$0xff] %vm17, 0.0
      %22 = vst.msk [vmem:[#allocation2 + $0x20] sm:$0xff] %vm17, 0.0
      %23 = vst.msk [vmem:[#allocation2 + $0x28] sm:$0xff] %vm17, 0.0
      %24 = vst.msk [vmem:[#allocation2 + $0x30] sm:$0xff] %vm17, 0.0
      %25 = vst.msk [vmem:[#allocation2 + $0x38] sm:$0xff] %vm17, 0.0
      %26 = vst.msk [vmem:[#allocation2 + $0x40] sm:$0xff] %vm17, 0.0
      %27 = vst.msk [vmem:[#allocation2 + $0x48] sm:$0xff] %vm17, 0.0
      %28 = vst.msk [vmem:[#allocation2 + $0x50] sm:$0xff] %vm17, 0.0
      %29 = vst.msk [vmem:[#allocation2 + $0x58] sm:$0xff] %vm17, 0.0
      %30 = vst.msk [vmem:[#allocation2 + $0x60] sm:$0xff] %vm17, 0.0
      %31 = vst.msk [vmem:[#allocation2 + $0x68] sm:$0xff] %vm17, 0.0
      %32 = vst.msk [vmem:[#allocation2 + $0x70] sm:$0xff] %vm17, 0.0
      %33 = vst.msk [vmem:[#allocation2 + $0x78] sm:$0xff] %vm17, 0.0
    $region13: #{stem_conv.1} parent=1 // pred_fallthru
      _
    %v34 = vld [vmem:[#allocation2] sm:$0xff]
    %v35 = vld [vmem:[#allocation2 + $0x8] sm:$0xff]
    %v36 = vld [vmem:[#allocation2 + $0x10] sm:$0xff]
    %v37 = vld [vmem:[#allocation2 + $0x18] sm:$0xff]
    %v38 = vld [vmem:[#allocation2 + $0x20] sm:$0xff]
    %v39 = vld [vmem:[#allocation2 + $0x28] sm:$0xff]
    %v40 = vld [vmem:[#allocation2 + $0x30] sm:$0xff]
    %v41 = vld [vmem:[#allocation2 + $0x38] sm:$0xff]
    %v42 = vld [vmem:[#allocation2 + $0x40] sm:$0xff]
    %v43 = vld [vmem:[#allocation2 + $0x48] sm:$0xff]
    %v44 = vld [vmem:[#allocation2 + $0x50] sm:$0xff]
    %v45 = vld [vmem:[#allocation2 + $0x58] sm:$0xff]
    %v46 = vld [vmem:[#allocation2 + $0x60] sm:$0xff]
    %v47 = vld [vmem:[#allocation2 + $0x68] sm:$0xff]
    %v48 = vld [vmem:[#allocation2 + $0x70] sm:$0xff]
    %v49 = vld [vmem:[#allocation2 + $0x78] sm:$0xff]
    %v50 = vld [vmem:[%s0] sm:$0xff]
    %v51 = vld [vmem:[%s0 + $0x8] sm:$0xff]
    %v52 = vld [vmem:[%s0 + $0x10] sm:$0xff]
    %v53 = vld [vmem:[%s0 + $0x18] sm:$0xff]
    %v54 = vld [vmem:[%s0 + $0x20] sm:$0xff]
    %v55 = vld [vmem:[%s0 + $0x28] sm:$0xff]
    %v56 = vld [vmem:[%s0 + $0x30] sm:$0xff]
    %v57 = vld [vmem:[%s0 + $0x38] sm:$0xff]
    %v58 = vld [vmem:[%s0 + $0x40] sm:$0xff]
    %v59 = vld [vmem:[%s0 + $0x48] sm:$0xff]
    %v60 = vld [vmem:[%s0 + $0x50] sm:$0xff]
    %v61 = vld [vmem:[%s0 + $0x58] sm:$0xff]
    %v62 = vld [vmem:[%s0 + $0x60] sm:$0xff]
    %v63 = vld [vmem:[%s0 + $0x68] sm:$0xff]
    %v64 = vld [vmem:[%s0 + $0x70] sm:$0xff]
    %v65 = vld [vmem:[%s0 + $0x78] sm:$0xff]
    %v66 = vld [vmem:[%s1] sm:$0xf]
    %v67 = vld [vmem:[%s1 + $0x4] sm:$0xf]
    %v68 = vld [vmem:[%s1 + $0x8] sm:$0xf]
    %v69 = vld [vmem:[%s1 + $0xc] sm:$0xf]
    %v70 = vld [vmem:[%s1 + $0x10] sm:$0xf]
    %v71 = vld [vmem:[%s1 + $0x14] sm:$0xf]
    %v72 = vld [vmem:[%s1 + $0x18] sm:$0xf]
    %v73 = vld [vmem:[%s1 + $0x1c] sm:$0xf]
    %v74 = vld [vmem:[%s1 + $0x20] sm:$0xf]
    %v75 = vld [vmem:[%s1 + $0x24] sm:$0xf]
    %v76 = vld [vmem:[%s1 + $0x28] sm:$0xf]
    %v77 = vld [vmem:[%s1 + $0x2c] sm:$0xf]
    %v78 = vld [vmem:[%s1 + $0x30] sm:$0xf]
    %v79 = vld [vmem:[%s1 + $0x34] sm:$0xf]
    %v80 = vld [vmem:[%s1 + $0x38] sm:$0xf]
    %v81 = vld [vmem:[%s1 + $0x3c] sm:$0xf]
    %v82 = vld [vmem:[%s1 + $0x40] sm:$0xf]
    %v83 = vld [vmem:[%s1 + $0x44] sm:$0xf]
    %v84 = vld [vmem:[%s1 + $0x48] sm:$0xf]
    %v85 = vld [vmem:[%s1 + $0x4c] sm:$0xf]
    %v86 = vld [vmem:[%s1 + $0x50] sm:$0xf]
    %v87 = vld [vmem:[%s1 + $0x54] sm:$0xf]
    %v88 = vld [vmem:[%s1 + $0x58] sm:$0xf]
    %v89 = vld [vmem:[%s1 + $0x5c] sm:$0xf]
    %v90 = vld [vmem:[%s1 + $0x60] sm:$0x3]
    %v107 = vunpack.c.l.b16 %v50
    %v108 = vunpack.c.h.b16 %v50
    %v109 = vunpack.c.l.b16 %v51
    %v110 = vunpack.c.h.b16 %v51
    %v111 = vunpack.c.l.b16 %v52
    %v112 = vunpack.c.h.b16 %v52
    %v113 = vunpack.c.l.b16 %v53
    %v114 = vunpack.c.h.b16 %v53
    %v115 = vunpack.c.l.b16 %v54
    %v116 = vunpack.c.h.b16 %v54
    %v117 = vunpack.c.l.b16 %v55
    %v118 = vunpack.c.h.b16 %v55
    %v119 = vunpack.c.l.b16 %v56
    %v120 = vunpack.c.h.b16 %v56
    %v121 = vunpack.c.l.b16 %v57
    %v122 = vunpack.c.h.b16 %v57
    %v123 = vunpack.c.l.b16 %v58
    %v124 = vunpack.c.h.b16 %v58
    %v125 = vunpack.c.l.b16 %v59
    %v126 = vunpack.c.h.b16 %v59
    %v127 = vunpack.c.l.b16 %v60
    %v128 = vunpack.c.h.b16 %v60
    %v129 = vunpack.c.l.b16 %v61
    %v130 = vunpack.c.h.b16 %v61
    %v131 = vunpack.c.l.b16 %v62
    %v132 = vunpack.c.h.b16 %v62
    %v133 = vunpack.c.l.b16 %v63
    %v134 = vunpack.c.h.b16 %v63
    %v135 = vunpack.c.l.b16 %v64
    %v136 = vunpack.c.h.b16 %v64
    %v137 = vunpack.c.l.b16 %v65
    %v138 = vunpack.c.h.b16 %v65
    %v139 = vpack.c.b16 %v109, %v107
    %v140 = vpack.c.b16 %v110, %v108
    %v141 = vpack.c.b16 %v113, %v111
    %v142 = vpack.c.b16 %v114, %v112
    %v143 = vpack.c.b16 %v117, %v115
    %v144 = vpack.c.b16 %v118, %v116
    %v145 = vpack.c.b16 %v121, %v119
    %v146 = vpack.c.b16 %v122, %v120
    %v147 = vpack.c.b16 %v125, %v123
    %v148 = vpack.c.b16 %v126, %v124
    %v149 = vpack.c.b16 %v129, %v127
    %v150 = vpack.c.b16 %v130, %v128
    %v151 = vpack.c.b16 %v133, %v131
    %v152 = vpack.c.b16 %v134, %v132
    %v153 = vpack.c.b16 %v137, %v135
    %v154 = vpack.c.b16 %v138, %v136
    %v188 = vunpack.c.l.b16 %v66
    %v189 = vunpack.c.l.b16 %v67
    %v190 = vunpack.c.l.b16 %v68
    %v191 = vunpack.c.l.b16 %v69
    %v192 = vunpack.c.l.b16 %v70
    %v193 = vunpack.c.l.b16 %v71
    %v194 = vunpack.c.l.b16 %v72
    %v195 = vunpack.c.l.b16 %v73
    %v196 = vunpack.c.l.b16 %v74
    %v197 = vunpack.c.l.b16 %v75
    %v198 = vunpack.c.l.b16 %v76
    %v199 = vunpack.c.l.b16 %v77
    %v200 = vunpack.c.l.b16 %v78
    %v201 = vunpack.c.l.b16 %v79
    %v202 = vunpack.c.l.b16 %v80
    %v203 = vunpack.c.l.b16 %v81
    %v204 = vunpack.c.l.b16 %v82
    %v205 = vunpack.c.l.b16 %v83
    %v206 = vunpack.c.l.b16 %v84
    %v207 = vunpack.c.l.b16 %v85
    %v208 = vunpack.c.l.b16 %v86
    %v209 = vunpack.c.l.b16 %v87
    %v210 = vunpack.c.l.b16 %v88
    %v211 = vunpack.c.l.b16 %v89
    %v212 = vunpack.c.l.b16 %v90
    %v213 = vpack.c.b16 %v189, %v188
    %v214 = vpack.c.b16 %v191, %v190
    %v215 = vpack.c.b16 %v193, %v192
    %v216 = vpack.c.b16 %v195, %v194
    %v217 = vpack.c.b16 %v197, %v196
    %v218 = vpack.c.b16 %v199, %v198
    %v219 = vpack.c.b16 %v201, %v200
    %v220 = vpack.c.b16 %v203, %v202
    %v221 = vpack.c.b16 %v205, %v204
    %v222 = vpack.c.b16 %v207, %v206
    %v223 = vpack.c.b16 %v209, %v208
    %v224 = vpack.c.b16 %v211, %v210
    %v225 = vpack.c.b16 %v212, %v212
    %vm238 = vcmask 556032
    %v240 = vsel %vm238, %v140, 0
    %v243 = vsel %vm238, %v142, 0
    %v246 = vsel %vm238, %v144, 0
    %v249 = vsel %vm238, %v146, 0
    %v252 = vsel %vm238, %v148, 0
    %v255 = vsel %vm238, %v150, 0
    %v258 = vsel %vm238, %v152, 0
    %v261 = vsel %vm238, %v154, 0
    %vm263 = vcmask 1041408
    %v265 = vsel %vm263, %v225, 0
    %267 = vmatprep.subr.bf16.mxu0 0
    %268 = vmatpush1.bf16.msra.mxu0 %v213
    %269 = vmatprep.subr.bf16.mxu0 0
    %270 = vmatpush1.bf16.msra.mxu0 %v214
    %271 = vmatprep.subr.bf16.mxu0 0
    %272 = vmatpush1.bf16.msra.mxu0 %v215
    %273 = vmatprep.subr.bf16.mxu0 0
    %274 = vmatpush1.bf16.msra.mxu0 %v216
    %275 = vmatprep.subr.bf16.mxu0 0
    %276 = vmatpush1.bf16.msra.mxu0 %v217
    %277 = vmatprep.subr.bf16.mxu0 0
    %278 = vmatpush1.bf16.msra.mxu0 %v218
    %279 = vmatprep.subr.bf16.mxu0 0
    %280 = vmatpush1.bf16.msra.mxu0 %v219
    %281 = vmatprep.subr.bf16.mxu0 0
    %282 = vmatpush1.bf16.msra.mxu0 %v220
    %283 = vmatprep.subr.bf16.mxu0 0
    %284 = vmatpush1.bf16.msra.mxu0 %v221
    %285 = vmatprep.subr.bf16.mxu0 0
    %286 = vmatpush1.bf16.msra.mxu0 %v222
    %287 = vmatprep.subr.bf16.mxu0 0
    %288 = vmatpush1.bf16.msra.mxu0 %v223
    %289 = vmatprep.subr.bf16.mxu0 0
    %290 = vmatpush1.bf16.msra.mxu0 %v224
    %291 = vmatprep.subr.bf16.mxu0 0
    %292 = vmatpush1.bf16.msra.mxu0 %v265
    %293 = vmatprep.subr.bf16.mxu0 0
    %294 = vmatpush1.bf16.msra.mxu0 0
    %295 = vmatprep.subr.bf16.mxu0 0
    %296 = vmatpush1.bf16.msra.mxu0 0
    %297 = vmatprep.subr.bf16.mxu0 0
    %298 = vmatpush1.bf16.msra.mxu0 0
    %299 = vmatprep.mubr.bf16.mxu0 %v240
    %300 = vmatmul.mubr.bf16.gmra.mrb[0].mxu0 %v139
    %v301 = vpop.f32.mrb[0].mxu0
    %v302 = vadd.f32 0.0, %v301
    %v303 = vpop.f32.mrb[0].mxu0
    %v304 = vpop.f32.mrb[0].mxu0
    %v305 = vadd.f32 0.0, %v304
    %v306 = vpop.f32.mrb[0].mxu0
    %307 = vmatprep.mubr.bf16.mxu0 %v243
    %308 = vmatmul.mubr.bf16.gmra.mrb[0].mxu0 %v141
    %v309 = vpop.f32.mrb[0].mxu0
    %v310 = vadd.f32 0.0, %v309
    %v311 = vpop.f32.mrb[0].mxu0
    %v312 = vpop.f32.mrb[0].mxu0
    %v313 = vadd.f32 0.0, %v312
    %v314 = vpop.f32.mrb[0].mxu0
    %315 = vmatprep.mubr.bf16.mxu0 %v246
    %316 = vmatmul.mubr.bf16.gmra.mrb[0].mxu0 %v143
    %v317 = vpop.f32.mrb[0].mxu0
    %v318 = vadd.f32 0.0, %v317
    %v319 = vpop.f32.mrb[0].mxu0
    %v320 = vpop.f32.mrb[0].mxu0
    %v321 = vadd.f32 0.0, %v320
    %v322 = vpop.f32.mrb[0].mxu0
    %323 = vmatprep.mubr.bf16.mxu0 %v249
    %324 = vmatmul.mubr.bf16.gmra.mrb[0].mxu0 %v145
    %v325 = vpop.f32.mrb[0].mxu0
    %v326 = vadd.f32 0.0, %v325
    %v327 = vpop.f32.mrb[0].mxu0
    %v328 = vpop.f32.mrb[0].mxu0
    %v329 = vadd.f32 0.0, %v328
    %v330 = vpop.f32.mrb[0].mxu0
    %331 = vmatprep.mubr.bf16.mxu0 %v252
    %332 = vmatmul.mubr.bf16.gmra.mrb[0].mxu0 %v147
    %v333 = vpop.f32.mrb[0].mxu0
    %v334 = vadd.f32 0.0, %v333
    %v335 = vpop.f32.mrb[0].mxu0
    %v336 = vpop.f32.mrb[0].mxu0
    %v337 = vadd.f32 0.0, %v336
    %v338 = vpop.f32.mrb[0].mxu0
    %339 = vmatprep.mubr.bf16.mxu0 %v255
    %340 = vmatmul.mubr.bf16.gmra.mrb[0].mxu0 %v149
    %v341 = vpop.f32.mrb[0].mxu0
    %v342 = vadd.f32 0.0, %v341
    %v343 = vpop.f32.mrb[0].mxu0
    %v344 = vpop.f32.mrb[0].mxu0
    %v345 = vadd.f32 0.0, %v344
    %v346 = vpop.f32.mrb[0].mxu0
    %347 = vmatprep.mubr.bf16.mxu0 %v258
    %348 = vmatmul.mubr.bf16.gmra.mrb[0].mxu0 %v151
    %v349 = vpop.f32.mrb[0].mxu0
    %v350 = vadd.f32 0.0, %v349
    %v351 = vpop.f32.mrb[0].mxu0
    %v352 = vpop.f32.mrb[0].mxu0
    %v353 = vadd.f32 0.0, %v352
    %v354 = vpop.f32.mrb[0].mxu0
    %355 = vmatprep.mubr.bf16.mxu0 %v261
    %356 = vmatmul.mubr.bf16.gmra.mrb[0].mxu0 %v153
    %v357 = vpop.f32.mrb[0].mxu0
    %v358 = vadd.f32 0.0, %v357
    %v359 = vpop.f32.mrb[0].mxu0
    %v360 = vpop.f32.mrb[0].mxu0
    %v361 = vadd.f32 0.0, %v360
    %v362 = vpop.f32.mrb[0].mxu0
    %363 = vdwg.mxu0
    %v364 = vadd.f32 %v34, %v302
    %v365 = vadd.f32 %v35, %v305
    %v366 = vadd.f32 %v36, %v310
    %v367 = vadd.f32 %v37, %v313
    %v368 = vadd.f32 %v38, %v318
    %v369 = vadd.f32 %v39, %v321
    %v370 = vadd.f32 %v40, %v326
    %v371 = vadd.f32 %v41, %v329
    %v372 = vadd.f32 %v42, %v334
    %v373 = vadd.f32 %v43, %v337
    %v374 = vadd.f32 %v44, %v342
    %v375 = vadd.f32 %v45, %v345
    %v376 = vadd.f32 %v46, %v350
    %v377 = vadd.f32 %v47, %v353
    %v378 = vadd.f32 %v48, %v358
    %v379 = vadd.f32 %v49, %v361
    %vm380 = vcmask 523264
    %381 = vst.msk [vmem:[#allocation2] sm:$0xff] %vm380, %v364
    %382 = vst.msk [vmem:[#allocation2 + $0x8] sm:$0xff] %vm380, %v365
    %383 = vst.msk [vmem:[#allocation2 + $0x10] sm:$0xff] %vm380, %v366
    %384 = vst.msk [vmem:[#allocation2 + $0x18] sm:$0xff] %vm380, %v367
    %385 = vst.msk [vmem:[#allocation2 + $0x20] sm:$0xff] %vm380, %v368
    %386 = vst.msk [vmem:[#allocation2 + $0x28] sm:$0xff] %vm380, %v369
    %387 = vst.msk [vmem:[#allocation2 + $0x30] sm:$0xff] %vm380, %v370
    %388 = vst.msk [vmem:[#allocation2 + $0x38] sm:$0xff] %vm380, %v371
    %389 = vst.msk [vmem:[#allocation2 + $0x40] sm:$0xff] %vm380, %v372
    %390 = vst.msk [vmem:[#allocation2 + $0x48] sm:$0xff] %vm380, %v373
    %391 = vst.msk [vmem:[#allocation2 + $0x50] sm:$0xff] %vm380, %v374
    %392 = vst.msk [vmem:[#allocation2 + $0x58] sm:$0xff] %vm380, %v375
    %393 = vst.msk [vmem:[#allocation2 + $0x60] sm:$0xff] %vm380, %v376
    %394 = vst.msk [vmem:[#allocation2 + $0x68] sm:$0xff] %vm380, %v377
    %395 = vst.msk [vmem:[#allocation2 + $0x70] sm:$0xff] %vm380, %v378
    %396 = vst.msk [vmem:[#allocation2 + $0x78] sm:$0xff] %vm380, %v379
    // Predicated region
    $region14: #{stem_conv.1} parent=1 // pred_check
      %p397 = pneg %p13
    $region15: #{stem_conv.1} parent=1 // pred_check_branch
      %399 = sbr.rel (%p397) target = $region17
    $region16: #{stem_conv.1} parent=1 // pred_region
      %v400 = vld [vmem:[#allocation2] sm:$0xff]
      %v401 = vld [vmem:[#allocation2 + $0x8] sm:$0xff]
      %v402 = vld [vmem:[#allocation2 + $0x10] sm:$0xff]
      %v403 = vld [vmem:[#allocation2 + $0x18] sm:$0xff]
      %v404 = vld [vmem:[#allocation2 + $0x20] sm:$0xff]
      %v405 = vld [vmem:[#allocation2 + $0x28] sm:$0xff]
      %v406 = vld [vmem:[#allocation2 + $0x30] sm:$0xff]
      %v407 = vld [vmem:[#allocation2 + $0x38] sm:$0xff]
      %v408 = vld [vmem:[#allocation2 + $0x40] sm:$0xff]
      %v409 = vld [vmem:[#allocation2 + $0x48] sm:$0xff]
      %v410 = vld [vmem:[#allocation2 + $0x50] sm:$0xff]
      %v411 = vld [vmem:[#allocation2 + $0x58] sm:$0xff]
      %v412 = vld [vmem:[#allocation2 + $0x60] sm:$0xff]
      %v413 = vld [vmem:[#allocation2 + $0x68] sm:$0xff]
      %v414 = vld [vmem:[#allocation2 + $0x70] sm:$0xff]
      %v415 = vld [vmem:[#allocation2 + $0x78] sm:$0xff]
      %v416 = vpack.c.bf16 %v401, %v400
      %v417 = vpack.c.bf16 %v403, %v402
      %v418 = vpack.c.bf16 %v405, %v404
      %v419 = vpack.c.bf16 %v407, %v406
      %v420 = vpack.c.bf16 %v409, %v408
      %v421 = vpack.c.bf16 %v411, %v410
      %v422 = vpack.c.bf16 %v413, %v412
      %v423 = vpack.c.bf16 %v415, %v414
      %v432 = vunpack.c.l.b16 %v416
      %v433 = vunpack.c.h.b16 %v416
      %v434 = vunpack.c.l.b16 %v417
      %v435 = vunpack.c.h.b16 %v417
      %v436 = vunpack.c.l.b16 %v418
      %v437 = vunpack.c.h.b16 %v418
      %v438 = vunpack.c.l.b16 %v419
      %v439 = vunpack.c.h.b16 %v419
      %v440 = vunpack.c.l.b16 %v420
      %v441 = vunpack.c.h.b16 %v420
      %v442 = vunpack.c.l.b16 %v421
      %v443 = vunpack.c.h.b16 %v421
      %v444 = vunpack.c.l.b16 %v422
      %v445 = vunpack.c.h.b16 %v422
      %v446 = vunpack.c.l.b16 %v423
      %v447 = vunpack.c.h.b16 %v423
      %v448 = vpack.c.b16 %v432, %v432
      %v449 = vpack.c.b16 %v433, %v433
      %v450 = vpack.c.b16 %v434, %v434
      %v451 = vpack.c.b16 %v435, %v435
      %v452 = vpack.c.b16 %v436, %v436
      %v453 = vpack.c.b16 %v437, %v437
      %v454 = vpack.c.b16 %v438, %v438
      %v455 = vpack.c.b16 %v439, %v439
      %v456 = vpack.c.b16 %v440, %v440
      %v457 = vpack.c.b16 %v441, %v441
      %v458 = vpack.c.b16 %v442, %v442
      %v459 = vpack.c.b16 %v443, %v443
      %v460 = vpack.c.b16 %v444, %v444
      %v461 = vpack.c.b16 %v445, %v445
      %v462 = vpack.c.b16 %v446, %v446
      %v463 = vpack.c.b16 %v447, %v447
      %vm480 = vcmask 519168
      %481 = vst.msk [vmem:[#allocation3] sm:$0xf] %vm480, %v448
      %482 = vst.msk [vmem:[#allocation3 + $0x4] sm:$0xf] %vm480, %v449
      %483 = vst.msk [vmem:[#allocation3 + $0x8] sm:$0xf] %vm480, %v450
      %484 = vst.msk [vmem:[#allocation3 + $0xc] sm:$0xf] %vm480, %v451
      %485 = vst.msk [vmem:[#allocation3 + $0x10] sm:$0xf] %vm480, %v452
      %486 = vst.msk [vmem:[#allocation3 + $0x14] sm:$0xf] %vm480, %v453
      %487 = vst.msk [vmem:[#allocation3 + $0x18] sm:$0xf] %vm480, %v454
      %488 = vst.msk [vmem:[#allocation3 + $0x1c] sm:$0xf] %vm480, %v455
      %489 = vst.msk [vmem:[#allocation3 + $0x20] sm:$0xf] %vm480, %v456
      %490 = vst.msk [vmem:[#allocation3 + $0x24] sm:$0xf] %vm480, %v457
      %491 = vst.msk [vmem:[#allocation3 + $0x28] sm:$0xf] %vm480, %v458
      %492 = vst.msk [vmem:[#allocation3 + $0x2c] sm:$0xf] %vm480, %v459
      %493 = vst.msk [vmem:[#allocation3 + $0x30] sm:$0xf] %vm480, %v460
      %494 = vst.msk [vmem:[#allocation3 + $0x34] sm:$0xf] %vm480, %v461
      %495 = vst.msk [vmem:[#allocation3 + $0x38] sm:$0xf] %vm480, %v462
      %496 = vst.msk [vmem:[#allocation3 + $0x3c] sm:$0xf] %vm480, %v463
    $region17: #{stem_conv.1} parent=1 // pred_fallthru
      _
    // Predicated region
    $region18: #{stem_conv.1} parent=1 // pred_check
      _
    $region19: #{stem_conv.1} parent=1 // pred_check_branch
      %498 = sbr.rel (0) target = $region21
    $region20: #{stem_conv.1} parent=1 // pred_region
      %s500 = ssub.s32 1024, 1024
      %501 = vsyncadd [#allocation4], %s500
      %s502 = sshll.u32 [#allocation3], 4
      %s503 = int_to_ptr.vmem [resolvable:$true] %s502
      %508 = dma.vmem_to_hbm [thread:$0]  %s503, 1024, %s2, [#allocation4], 64, 64, 4
    $region21: #{stem_conv.1} parent=1 // pred_fallthru
      _
    // Predicated region
    $region22: #{stem_conv.1} parent=1 // pred_check
      _
    $region23: #{stem_conv.1} parent=1 // pred_check_branch
      %510 = sbr.rel (0) target = $region25
    $region24: #{stem_conv.1} parent=1 // pred_region
      %511 = dma.done [#allocation4], 1024
    $region25: #{stem_conv.1} parent=1 // pred_fallthru
      _
    %512 = vsyncpa [#allocation4], 1

</llo_original>
